<compile_context>
chip_gen: v7x
topology: tpu7x:2x2x1
jax: 0.10.0
libtpu: 0.0.40
codegen_flags: <defaults>
</compile_context>

<pallas_src>
import functools
import math

import jax
import jax.numpy as jnp
from jax.experimental import pallas as pl
from jax.experimental.pallas import tpu as pltpu

_EPS = 1e-12          # torch.nn.functional.normalize default eps
_NEG_INF = -1e30      # finite mask value for padded class columns


def _round_up(x, m):
    return (x + m - 1) // m * m


# ----------------------------------------------------------------------------
# Pass 1: row-wise L2 normalization of the class weights, ArcFace scale s
# folded in, bf16 cast.  Purely mem-bound -> large row tiles.
# ----------------------------------------------------------------------------
def _norm_weight_kernel(w_ref, wn_ref, *, s):
    w = w_ref[...].astype(jnp.float32)
    inv = jax.lax.rsqrt(
        jnp.maximum(jnp.sum(w * w, axis=-1, keepdims=True), _EPS * _EPS))
    # s folded here: MXU in pass 2 emits s*cos directly (s=64 is a power of
    # two, so bf16(s*w_n) == s*bf16(w_n) exactly).
    wn_ref[...] = (w * (inv * s)).astype(jnp.bfloat16)


def _normalize_weight_bf16(w_padded, tc1, s):
    c_pad, e_pad = w_padded.shape
    return pl.pallas_call(
        functools.partial(_norm_weight_kernel, s=s),
        out_shape=jax.ShapeDtypeStruct((c_pad, e_pad), jnp.bfloat16),
        grid_spec=pltpu.PrefetchScalarGridSpec(
            num_scalar_prefetch=0,
            grid=(c_pad // tc1,),
            in_specs=[pl.BlockSpec((tc1, e_pad), lambda j: (j, 0))],
            out_specs=pl.BlockSpec((tc1, e_pad), lambda j: (j, 0)),
        ),
        compiler_params=pltpu.CompilerParams(
            dimension_semantics=("parallel",),
            vmem_limit_bytes=48 * 1024 * 1024),
    )(w_padded)


# ----------------------------------------------------------------------------
# Pass 2: fused cosine matmul + online-softmax cross-entropy, with the ArcFace
# margin applied as a per-row (tb, 1) correction in the finalize step.
# Outputs the per-row loss (padded rows -> 0); the batch mean is done in the
# wrapper.
# ----------------------------------------------------------------------------
def _fused_arc_ce_kernel(emb_ref, wn_ref, lab_ref, loss_ref,
                         embn_sc, m_sc, l_sc, t_sc,
                         *, s, cos_m, sin_m, num_classes, num_valid_rows,
                         tb, tc):
    i = pl.program_id(0)          # batch-tile index (parallel)
    j = pl.program_id(1)          # class-tile index (arbitrary, reduction)
    j_last = pl.num_programs(1) - 1

    # Normalize the embedding tile once per batch tile; cache bf16 in VMEM.
    @pl.when(j == 0)
    def _init():
        emb = emb_ref[...].astype(jnp.float32)
        inv = jax.lax.rsqrt(
            jnp.maximum(jnp.sum(emb * emb, axis=-1, keepdims=True),
                        _EPS * _EPS))
        embn_sc[...] = (emb * inv).astype(jnp.bfloat16)
        m_sc[...] = jnp.full_like(m_sc, _NEG_INF)
        l_sc[...] = jnp.zeros_like(l_sc)
        t_sc[...] = jnp.zeros_like(t_sc)

    # Scaled cosine logits tile on the MXU: bf16 x bf16 -> fp32 accumulation,
    # contracting the last dims of both operands (no weight transpose).
    # Pass 1 folded s, so this is already s*cos.
    scos = jax.lax.dot_general(
        embn_sc[...], wn_ref[...],
        dimension_numbers=(((1,), (1,)), ((), ())),
        preferred_element_type=jnp.float32)                 # (tb, tc)

    # Extract the raw (un-margined) target logit for this tile into (tb, 1).
    col = jax.lax.broadcasted_iota(jnp.int32, scos.shape, 1)
    is_target = col == (lab_ref[...] - j * tc)
    t_sc[...] += jnp.sum(jnp.where(is_target, scos, 0.0),
                         axis=-1, keepdims=True)

    # Padded tail columns exist only when C is not tile-aligned, and only on
    # the last class tile -> build the -inf mask just there.
    if num_classes % tc != 0:
        scos = jax.lax.cond(
            j == j_last,
            lambda x: jnp.where(col < (num_classes - j * tc), x, _NEG_INF),
            lambda x: x,
            scos)

    # Online logsumexp over class tiles (raw logits; the target column is
    # corrected to its margined value in the finalize step).
    m_prev = m_sc[...]
    m_new = jnp.maximum(m_prev, jnp.max(scos, axis=-1, keepdims=True))
    alpha = jnp.exp(m_prev - m_new)
    l_sc[...] = alpha * l_sc[...] + jnp.sum(jnp.exp(scos - m_new),
                                            axis=-1, keepdims=True)
    m_sc[...] = m_new

    @pl.when(j == j_last)
    def _finalize():
        m = m_sc[...]
        t_raw = t_sc[...]                                   # s * cos(theta)
        # ArcFace margin on the (tb, 1) target value only.
        cos_t = jnp.clip(t_raw * (1.0 / s), -1.0 + 1e-7, 1.0 - 1e-7)
        sin_t = jnp.sqrt(1.0 - cos_t * cos_t)
        t_margin = s * (cos_t * cos_m - sin_t * sin_m)      # s * cos(theta+m)
        # Swap the raw target term for the margined one in the denominator.
        l_corr = l_sc[...] - jnp.exp(t_raw - m) + jnp.exp(t_margin - m)
        l_corr = jnp.maximum(l_corr, 1e-30)
        per_row = m + jnp.log(l_corr) - t_margin
        row = jax.lax.broadcasted_iota(jnp.int32, per_row.shape, 0) + i * tb
        loss_ref[...] = jnp.where(row < num_valid_rows, per_row, 0.0)


def dyn_arc_loss(embeddings, weight, labels, *, s=64.0, margin=0.5,
                 tb=256, tc=2048):
    """Fused DynArcLinear forward: returns the scalar mean cross-entropy."""
    B, E = embeddings.shape
    C, E2 = weight.shape
    assert E == E2

    # Tile sizing.  e_pad: 128-multiple (round to 256 on v6e/v7x only if the
    # kernel is actually MXU-bound).  tb/tc clamped to the problem size.
    e_pad = _round_up(E, 128)
    tb = max(8, min(_round_up(tb, 8), _round_up(B, 8)))
    b_pad = _round_up(B, tb)
    tc = max(128, min(_round_up(tc, 128), _round_up(C, 128)))
    c_pad = _round_up(C, tc)

    # VMEM-budget guard (target <= ~40 MiB: v7x has 64 MiB / TC, 32 MiB scoped
    # default; v5e/v6e have 128 MiB so this only ever bites on v7x shapes).
    def _vmem_bytes(tb_, tc_):
        return (2 * tc_ * e_pad * 2      # double-buffered bf16 weight block
                + 2 * tb_ * e_pad * 4    # double-buffered emb block (f32)
                + tb_ * e_pad * 2        # bf16 normalized-emb scratch
                + 8 * tb_ * tc_ * 4)     # fp32 elementwise temporaries

    _VMEM_TARGET = 40 * 1024 * 1024
    while _vmem_bytes(tb, tc) > _VMEM_TARGET and tc > 512:
        tc = max(512, _round_up(tc // 2, 128))
        c_pad = _round_up(C, tc)
    while _vmem_bytes(tb, tc) > _VMEM_TARGET and tb > 64:
        tb = max(64, _round_up(tb // 2, 8))
        b_pad = _round_up(B, tb)

    # Pad only when the shapes are not already tile-aligned (skips a full
    # extra HBM read+write of the class-weight matrix in the aligned case).
    if (C, E) != (c_pad, e_pad):
        w_in = jnp.pad(weight, ((0, c_pad - C), (0, e_pad - E)))
    else:
        w_in = weight
    if (B, E) != (b_pad, e_pad):
        emb_in = jnp.pad(embeddings, ((0, b_pad - B), (0, e_pad - E)))
    else:
        emb_in = embeddings
    lab_in = labels.astype(jnp.int32)
    if B != b_pad:
        lab_in = jnp.pad(lab_in, (0, b_pad - B))
    lab_in = lab_in.reshape(b_pad, 1)

    # Pass 1 row tile: decoupled from tc, grown toward 2048 rows (mem-bound
    # pass; big tiles amortize per-step overhead) within a VMEM bound.
    tc1 = tc
    while (tc1 * 2 <= 2048 and c_pad % (tc1 * 2) == 0
           and (tc1 * 2) * e_pad * 16 <= 40 * 1024 * 1024):
        tc1 *= 2

    # Pass 1: s-scaled normalized bf16 class weights.
    w_n = _normalize_weight_bf16(w_in, tc1, float(s))

    # Pass 2: fused cosine matmul + margin + online-softmax cross-entropy.
    # NOTE (v7x megacore): grid dim 0 (batch tiles) is the parallel axis; for
    # best v7x utilization keep b_pad // tb >= 2 (shrink tb for small B).
    kernel = functools.partial(
        _fused_arc_ce_kernel,
        s=float(s), cos_m=math.cos(margin), sin_m=math.sin(margin),
        num_classes=C, num_valid_rows=B, tb=tb, tc=tc)

    per_row = pl.pallas_call(
        kernel,
        out_shape=jax.ShapeDtypeStruct((b_pad, 1), jnp.float32),
        grid_spec=pltpu.PrefetchScalarGridSpec(
            num_scalar_prefetch=0,
            grid=(b_pad // tb, c_pad // tc),
            in_specs=[
                pl.BlockSpec((tb, e_pad), lambda i, j: (i, 0)),   # embeddings
                pl.BlockSpec((tc, e_pad), lambda i, j: (j, 0)),   # s*norm_w bf16
                pl.BlockSpec((tb, 1), lambda i, j: (i, 0)),       # labels
            ],
            out_specs=pl.BlockSpec((tb, 1), lambda i, j: (i, 0)),
            scratch_shapes=[
                pltpu.VMEM((tb, e_pad), jnp.bfloat16),   # normalized emb tile
                pltpu.VMEM((tb, 1), jnp.float32),        # running max
                pltpu.VMEM((tb, 1), jnp.float32),        # running sum
                pltpu.VMEM((tb, 1), jnp.float32),        # raw target logit
            ]),
        compiler_params=pltpu.CompilerParams(
            dimension_semantics=("parallel", "arbitrary"),
            vmem_limit_bytes=48 * 1024 * 1024),
    )(emb_in, w_n, lab_in)

    return jnp.sum(per_row) / B


# ----------------------------------------------------------------------------
# Module analogue.
# ----------------------------------------------------------------------------
class DynArcLinear:
    def __init__(self, loss_function, embedding_size, num_classes, *, key,
                 s=64.0, margin=0.5):
        if not callable(loss_function):
            raise ValueError("loss_function must be callable")
        # TODO(synk): arbitrary user-supplied loss_function callables would
        # need the unfused (materialized-logits) path; the fused kernel
        # hard-codes the standard ArcFace additive angular margin (s, m).
        self.loss_function = loss_function
        self.embedding_size = embedding_size
        self.s = s
        self.margin = margin
        # torch.normal(0, 0.01, (num_classes, embedding_size))
        self.weight = 0.01 * jax.random.normal(
            key, (num_classes, embedding_size), dtype=jnp.float32)

    def __call__(self, embeddings, labels):
        return dyn_arc_loss(embeddings, self.weight, labels,
                            s=self.s, margin=self.margin)


# Representative injected margin callable (kept for interface compatibility;
# its math is fused inside the Pallas kernel).
def arcface_margin(logits, labels, norm_weight, s=64.0, m=0.5):
    del norm_weight
    cos = jnp.clip(logits, -1.0 + 1e-7, 1.0 - 1e-7)
    sin = jnp.sqrt(1.0 - cos * cos)
    cos_theta_plus_m = cos * math.cos(m) - sin * math.sin(m)
    onehot = jax.nn.one_hot(labels, logits.shape[1], dtype=logits.dtype)
    return s * jnp.where(onehot > 0, cos_theta_plus_m, logits)


# ----------------------------------------------------------------------------
# Pure-JAX reference (same bf16 MXU inputs / fp32 accumulation as the kernel).
# ----------------------------------------------------------------------------
def _reference_loss(embeddings, weight, labels, s=64.0, margin=0.5):
    emb = embeddings.astype(jnp.float32)
    w = weight.astype(jnp.float32)
    emb_n = emb * jax.lax.rsqrt(
        jnp.maximum(jnp.sum(emb * emb, -1, keepdims=True), _EPS * _EPS))
    w_n = w * jax.lax.rsqrt(
        jnp.maximum(jnp.sum(w * w, -1, keepdims=True), _EPS * _EPS))
    cos = jnp.dot(emb_n.astype(jnp.bfloat16), w_n.astype(jnp.bfloat16).T,
                  preferred_element_type=jnp.float32)
    logits = arcface_margin(cos, labels, w_n, s=s, m=margin)
    lse = jax.scipy.special.logsumexp(logits, axis=-1)
    onehot = jax.nn.one_hot(labels, w.shape[0], dtype=jnp.float32)
    tgt = jnp.sum(onehot * logits, axis=-1)
    return jnp.mean(lse - tgt)


if __name__ == "__main__":
    B, E, C = 12, 96, 300   # batch, embedding_size, num_classes (unaligned)

    key = jax.random.PRNGKey(0)
    k_w, k_emb, k_lab = jax.random.split(key, 3)

    module = DynArcLinear(arcface_margin, embedding_size=E, num_classes=C,
                          key=k_w)

    embeddings = jax.random.normal(k_emb, (B, E), dtype=jnp.float32)
    labels = jax.random.randint(k_lab, (B,), 0, C, dtype=jnp.int32)

    ref = _reference_loss(embeddings, module.weight, labels,
                          s=module.s, margin=module.margin)

    # Default tiling (single class tile at these small shapes).
    loss = module(embeddings, labels)
    jax.block_until_ready(loss)
    assert loss.shape == () and bool(jnp.isfinite(loss))
    assert abs(float(loss) - float(ref)) < 5e-3, (float(loss), float(ref))

    # Small explicit tiles: exercises multi-tile online softmax, padded batch
    # rows, padded class columns and both grid axes > 1.
    loss2 = dyn_arc_loss(embeddings, module.weight, labels,
                         s=module.s, margin=module.margin, tb=8, tc=128)
    jax.block_until_ready(loss2)
    assert abs(float(loss2) - float(ref)) < 5e-3, (float(loss2), float(ref))

    print("KERNEL_OK")
</pallas_src>

<mosaic_0001>
module attributes {stable_mosaic.version = 11 : i64} {
  func.func @_norm_weight_kernel(%arg0: i32, %arg1: memref<384x128xf32, #tpu.memory_space<vmem>>, %arg2: memref<384x128xbf16, #tpu.memory_space<vmem>>) attributes {dimension_semantics = [#tpu.dimension_semantics<parallel>], iteration_bounds = array<i64: 1>, scalar_prefetch = 0 : i64, scratch_operands = 0 : i64, tpu.core_type = #tpu.core_type<tc>, window_params = [{transform_indices = @transform_0, window_bounds = array<i64: 384, 128>}, {transform_indices = @transform_1, window_bounds = array<i64: 384, 128>}]} {
    %c0 = arith.constant 0 : index
    %c0_0 = arith.constant 0 : index
    %0 = vector.load %arg1[%c0, %c0_0] : memref<384x128xf32, #tpu.memory_space<vmem>>, vector<384x128xf32>
    %1 = arith.mulf %0, %0 : vector<384x128xf32>
    %cst = arith.constant dense<0.000000e+00> : vector<384xf32>
    %2 = vector.multi_reduction <add>, %1, %cst [1] : vector<384x128xf32> to vector<384xf32>
    %3 = vector.shape_cast %2 : vector<384xf32> to vector<384x1xf32>
    %cst_1 = arith.constant 1.000000e-24 : f32
    %4 = vector.broadcast %cst_1 : f32 to vector<384x1xf32>
    %5 = arith.maximumf %3, %4 : vector<384x1xf32>
    %6 = math.rsqrt %5 : vector<384x1xf32>
    %cst_2 = arith.constant 6.400000e+01 : f32
    %7 = vector.broadcast %cst_2 : f32 to vector<384x1xf32>
    %8 = arith.mulf %6, %7 : vector<384x1xf32>
    %9 = vector.broadcast %8 : vector<384x1xf32> to vector<384x128xf32>
    %10 = arith.mulf %0, %9 : vector<384x128xf32>
    %11 = arith.truncf %10 : vector<384x128xf32> to vector<384x128xbf16>
    %c0_3 = arith.constant 0 : index
    %c0_4 = arith.constant 0 : index
    %12 = vector.load %arg2[%c0_3, %c0_4] : memref<384x128xbf16, #tpu.memory_space<vmem>>, vector<384x128xbf16>
    tpu.vector_store %arg2[%c0_3, %c0_4], %11 {strides = array<i32>} : memref<384x128xbf16, #tpu.memory_space<vmem>>, vector<384x128xbf16>,
    return
  }
  func.func @transform_0(%arg0: i32) -> (i32, i32) {
    %c0_i32 = arith.constant 0 : i32
    %c0_i32_0 = arith.constant 0 : i32
    return %arg0, %c0_i32 : i32, i32
  }
  func.func @transform_1(%arg0: i32) -> (i32, i32) {
    %c0_i32 = arith.constant 0 : i32
    %c0_i32_0 = arith.constant 0 : i32
    return %arg0, %c0_i32 : i32, i32
  }
}

</mosaic_0001>

<llo_original>
// kernel: tpu_custom_call.1
$region0: #{tpu_custom_call.1}
  #allocation0 [shape = 'u32[]', space=smem, size = 0x4, offset = 0x4, fixed_abs, tag = 'smem constant byte address 0x4 - core index']
  #allocation1 [shape = 'u32[144,128]{1,0:T(1,128)}', space=vmem, size = 0x12000, scoped, tag = 'internal scratch']
  %s0 = inlined_call_operand.hbm [shape: f32[384,128], index: 0, kind: input, shape index: {}]
  %s1 = inlined_call_operand.hbm [shape: bf16[384,128], index: 1, kind: output, shape index: {}]
  %s2 = sld [smem:[#allocation0]]
  $region18: #{tpu_custom_call.1} parent=0
    _
  %s4 = ssub.s32 1, %s2
  %s5 = scalar_select 0, %s4, %s2
  $region1: #{tpu_custom_call.1} parent=0
    #allocation2 [shape = 'u8[196608]{0}', space=vmem, size = 0x30000, scoped, tag = 'input window, operand 0, single buffered']
    #allocation3 [shape = 's32[1]{0}', space=sflag, size = 0x4, scoped, tag = 'scoped memory for tpu_custom_call.1']
    #allocation4 [shape = 's32[1]{0}', space=sflag, size = 0x4, scoped, tag = 'scoped memory for tpu_custom_call.1']
    #allocation5 [shape = 'u8[98304]{0}', space=vmem, size = 0x18000, scoped, tag = 'output window, operand 0, single buffered']
    %6 = vsyncpa [#allocation3], 0
    %7 = vsyncpa [#allocation4], 0
    // Predicated region
    $region2: #{tpu_custom_call.1} parent=1 // pred_check
      _
    $region3: #{tpu_custom_call.1} parent=1 // pred_check_branch
      %9 = sbr.rel (0) target = $region5
    $region4: #{tpu_custom_call.1} parent=1 // pred_region
      %s11 = ssub.s32 6144, 6144
      %12 = vsyncadd [#allocation3], %s11
      %s13 = sshll.u32 [#allocation2], 4
      %s14 = int_to_ptr.vmem [resolvable:$true] %s13
      %19 = dma.hbm_to_vmem [thread:$0]  %s0, 6144, %s14, [#allocation3], 128, 128, 8
    $region5: #{tpu_custom_call.1} parent=1 // pred_fallthru
      _
    // Predicated region
    $region6: #{tpu_custom_call.1} parent=1 // pred_check
      _
    $region7: #{tpu_custom_call.1} parent=1 // pred_check_branch
      %21 = sbr.rel (0) target = $region9
    $region8: #{tpu_custom_call.1} parent=1 // pred_region
      %22 = dma.done [#allocation3], 6144
    $region9: #{tpu_custom_call.1} parent=1 // pred_fallthru
      _
    %v23 = vld [vmem:[#allocation2] sm:$0xff]
    %v24 = vld [vmem:[#allocation2 + $0x8] sm:$0xff]
    %v25 = vld [vmem:[#allocation2 + $0x10] sm:$0xff]
    %v26 = vld [vmem:[#allocation2 + $0x18] sm:$0xff]
    %v27 = vld [vmem:[#allocation2 + $0x20] sm:$0xff]
    %v28 = vld [vmem:[#allocation2 + $0x28] sm:$0xff]
    %v29 = vld [vmem:[#allocation2 + $0x30] sm:$0xff]
    %v30 = vld [vmem:[#allocation2 + $0x38] sm:$0xff]
    %v31 = vld [vmem:[#allocation2 + $0x40] sm:$0xff]
    %v32 = vld [vmem:[#allocation2 + $0x48] sm:$0xff]
    %v33 = vld [vmem:[#allocation2 + $0x50] sm:$0xff]
    %v34 = vld [vmem:[#allocation2 + $0x58] sm:$0xff]
    %v35 = vld [vmem:[#allocation2 + $0x60] sm:$0xff]
    %v36 = vld [vmem:[#allocation2 + $0x68] sm:$0xff]
    %v37 = vld [vmem:[#allocation2 + $0x70] sm:$0xff]
    %v38 = vld [vmem:[#allocation2 + $0x78] sm:$0xff]
    %v39 = vld [vmem:[#allocation2 + $0x80] sm:$0xff]
    %v40 = vld [vmem:[#allocation2 + $0x88] sm:$0xff]
    %v41 = vld [vmem:[#allocation2 + $0x90] sm:$0xff]
    %v42 = vld [vmem:[#allocation2 + $0x98] sm:$0xff]
    %v43 = vld [vmem:[#allocation2 + $0xa0] sm:$0xff]
    %v44 = vld [vmem:[#allocation2 + $0xa8] sm:$0xff]
    %v45 = vld [vmem:[#allocation2 + $0xb0] sm:$0xff]
    %v46 = vld [vmem:[#allocation2 + $0xb8] sm:$0xff]
    %v47 = vld [vmem:[#allocation2 + $0xc0] sm:$0xff]
    %v48 = vld [vmem:[#allocation2 + $0xc8] sm:$0xff]
    %v49 = vld [vmem:[#allocation2 + $0xd0] sm:$0xff]
    %v50 = vld [vmem:[#allocation2 + $0xd8] sm:$0xff]
    %v51 = vld [vmem:[#allocation2 + $0xe0] sm:$0xff]
    %v52 = vld [vmem:[#allocation2 + $0xe8] sm:$0xff]
    %v53 = vld [vmem:[#allocation2 + $0xf0] sm:$0xff]
    %v54 = vld [vmem:[#allocation2 + $0xf8] sm:$0xff]
    %v55 = vld [vmem:[#allocation2 + $0x100] sm:$0xff]
    %v56 = vld [vmem:[#allocation2 + $0x108] sm:$0xff]
    %v57 = vld [vmem:[#allocation2 + $0x110] sm:$0xff]
    %v58 = vld [vmem:[#allocation2 + $0x118] sm:$0xff]
    %v59 = vld [vmem:[#allocation2 + $0x120] sm:$0xff]
    %v60 = vld [vmem:[#allocation2 + $0x128] sm:$0xff]
    %v61 = vld [vmem:[#allocation2 + $0x130] sm:$0xff]
    %v62 = vld [vmem:[#allocation2 + $0x138] sm:$0xff]
    %v63 = vld [vmem:[#allocation2 + $0x140] sm:$0xff]
    %v64 = vld [vmem:[#allocation2 + $0x148] sm:$0xff]
    %v65 = vld [vmem:[#allocation2 + $0x150] sm:$0xff]
    %v66 = vld [vmem:[#allocation2 + $0x158] sm:$0xff]
    %v67 = vld [vmem:[#allocation2 + $0x160] sm:$0xff]
    %v68 = vld [vmem:[#allocation2 + $0x168] sm:$0xff]
    %v69 = vld [vmem:[#allocation2 + $0x170] sm:$0xff]
    %v70 = vld [vmem:[#allocation2 + $0x178] sm:$0xff]
    %v71 = vmul.f32 %v23, %v23
    %v72 = vmul.f32 %v24, %v24
    %v73 = vmul.f32 %v25, %v25
    %v74 = vmul.f32 %v26, %v26
    %v75 = vmul.f32 %v27, %v27
    %v76 = vmul.f32 %v28, %v28
    %v77 = vmul.f32 %v29, %v29
    %v78 = vmul.f32 %v30, %v30
    %v79 = vmul.f32 %v31, %v31
    %v80 = vmul.f32 %v32, %v32
    %v81 = vmul.f32 %v33, %v33
    %v82 = vmul.f32 %v34, %v34
    %v83 = vmul.f32 %v35, %v35
    %v84 = vmul.f32 %v36, %v36
    %v85 = vmul.f32 %v37, %v37
    %v86 = vmul.f32 %v38, %v38
    %v87 = vmul.f32 %v39, %v39
    %v88 = vmul.f32 %v40, %v40
    %v89 = vmul.f32 %v41, %v41
    %v90 = vmul.f32 %v42, %v42
    %v91 = vmul.f32 %v43, %v43
    %v92 = vmul.f32 %v44, %v44
    %v93 = vmul.f32 %v45, %v45
    %v94 = vmul.f32 %v46, %v46
    %v95 = vmul.f32 %v47, %v47
    %v96 = vmul.f32 %v48, %v48
    %v97 = vmul.f32 %v49, %v49
    %v98 = vmul.f32 %v50, %v50
    %v99 = vmul.f32 %v51, %v51
    %v100 = vmul.f32 %v52, %v52
    %v101 = vmul.f32 %v53, %v53
    %v102 = vmul.f32 %v54, %v54
    %v103 = vmul.f32 %v55, %v55
    %v104 = vmul.f32 %v56, %v56
    %v105 = vmul.f32 %v57, %v57
    %v106 = vmul.f32 %v58, %v58
    %v107 = vmul.f32 %v59, %v59
    %v108 = vmul.f32 %v60, %v60
    %v109 = vmul.f32 %v61, %v61
    %v110 = vmul.f32 %v62, %v62
    %v111 = vmul.f32 %v63, %v63
    %v112 = vmul.f32 %v64, %v64
    %v113 = vmul.f32 %v65, %v65
    %v114 = vmul.f32 %v66, %v66
    %v115 = vmul.f32 %v67, %v67
    %v116 = vmul.f32 %v68, %v68
    %v117 = vmul.f32 %v69, %v69
    %v118 = vmul.f32 %v70, %v70
    %119 = vadd.xlane.f32.xlu0 %v71
    %v120 = vpop.xlane.xlu0 %119
    %121 = vadd.xlane.f32.xlu0 %v72
    %v122 = vpop.xlane.xlu0 %121
    %123 = vadd.xlane.f32.xlu0 %v73
    %v124 = vpop.xlane.xlu0 %123
    %125 = vadd.xlane.f32.xlu0 %v74
    %v126 = vpop.xlane.xlu0 %125
    %127 = vadd.xlane.f32.xlu0 %v75
    %v128 = vpop.xlane.xlu0 %127
    %129 = vadd.xlane.f32.xlu0 %v76
    %v130 = vpop.xlane.xlu0 %129
    %131 = vadd.xlane.f32.xlu0 %v77
    %v132 = vpop.xlane.xlu0 %131
    %133 = vadd.xlane.f32.xlu0 %v78
    %v134 = vpop.xlane.xlu0 %133
    %135 = vadd.xlane.f32.xlu0 %v79
    %v136 = vpop.xlane.xlu0 %135
    %137 = vadd.xlane.f32.xlu0 %v80
    %v138 = vpop.xlane.xlu0 %137
    %139 = vadd.xlane.f32.xlu0 %v81
    %v140 = vpop.xlane.xlu0 %139
    %141 = vadd.xlane.f32.xlu0 %v82
    %v142 = vpop.xlane.xlu0 %141
    %143 = vadd.xlane.f32.xlu0 %v83
    %v144 = vpop.xlane.xlu0 %143
    %145 = vadd.xlane.f32.xlu0 %v84
    %v146 = vpop.xlane.xlu0 %145
    %147 = vadd.xlane.f32.xlu0 %v85
    %v148 = vpop.xlane.xlu0 %147
    %149 = vadd.xlane.f32.xlu0 %v86
    %v150 = vpop.xlane.xlu0 %149
    %151 = vadd.xlane.f32.xlu0 %v87
    %v152 = vpop.xlane.xlu0 %151
    %153 = vadd.xlane.f32.xlu0 %v88
    %v154 = vpop.xlane.xlu0 %153
    %155 = vadd.xlane.f32.xlu0 %v89
    %v156 = vpop.xlane.xlu0 %155
    %157 = vadd.xlane.f32.xlu0 %v90
    %v158 = vpop.xlane.xlu0 %157
    %159 = vadd.xlane.f32.xlu0 %v91
    %v160 = vpop.xlane.xlu0 %159
    %161 = vadd.xlane.f32.xlu0 %v92
    %v162 = vpop.xlane.xlu0 %161
    %163 = vadd.xlane.f32.xlu0 %v93
    %v164 = vpop.xlane.xlu0 %163
    %165 = vadd.xlane.f32.xlu0 %v94
    %v166 = vpop.xlane.xlu0 %165
    %167 = vadd.xlane.f32.xlu0 %v95
    %v168 = vpop.xlane.xlu0 %167
    %169 = vadd.xlane.f32.xlu0 %v96
    %v170 = vpop.xlane.xlu0 %169
    %171 = vadd.xlane.f32.xlu0 %v97
    %v172 = vpop.xlane.xlu0 %171
    %173 = vadd.xlane.f32.xlu0 %v98
    %v174 = vpop.xlane.xlu0 %173
    %175 = vadd.xlane.f32.xlu0 %v99
    %v176 = vpop.xlane.xlu0 %175
    %177 = vadd.xlane.f32.xlu0 %v100
    %v178 = vpop.xlane.xlu0 %177
    %179 = vadd.xlane.f32.xlu0 %v101
    %v180 = vpop.xlane.xlu0 %179
    %181 = vadd.xlane.f32.xlu0 %v102
    %v182 = vpop.xlane.xlu0 %181
    %183 = vadd.xlane.f32.xlu0 %v103
    %v184 = vpop.xlane.xlu0 %183
    %185 = vadd.xlane.f32.xlu0 %v104
    %v186 = vpop.xlane.xlu0 %185
    %187 = vadd.xlane.f32.xlu0 %v105
    %v188 = vpop.xlane.xlu0 %187
    %189 = vadd.xlane.f32.xlu0 %v106
    %v190 = vpop.xlane.xlu0 %189
    %191 = vadd.xlane.f32.xlu0 %v107
    %v192 = vpop.xlane.xlu0 %191
    %193 = vadd.xlane.f32.xlu0 %v108
    %v194 = vpop.xlane.xlu0 %193
    %195 = vadd.xlane.f32.xlu0 %v109
    %v196 = vpop.xlane.xlu0 %195
    %197 = vadd.xlane.f32.xlu0 %v110
    %v198 = vpop.xlane.xlu0 %197
    %199 = vadd.xlane.f32.xlu0 %v111
    %v200 = vpop.xlane.xlu0 %199
    %201 = vadd.xlane.f32.xlu0 %v112
    %v202 = vpop.xlane.xlu0 %201
    %203 = vadd.xlane.f32.xlu0 %v113
    %v204 = vpop.xlane.xlu0 %203
    %205 = vadd.xlane.f32.xlu0 %v114
    %v206 = vpop.xlane.xlu0 %205
    %207 = vadd.xlane.f32.xlu0 %v115
    %v208 = vpop.xlane.xlu0 %207
    %209 = vadd.xlane.f32.xlu0 %v116
    %v210 = vpop.xlane.xlu0 %209
    %211 = vadd.xlane.f32.xlu0 %v117
    %v212 = vpop.xlane.xlu0 %211
    %213 = vadd.xlane.f32.xlu0 %v118
    %v214 = vpop.xlane.xlu0 %213
    %v215 = vmax.f32 %v120, 1e-24
    %v216 = vmax.f32 %v122, 1e-24
    %v217 = vmax.f32 %v124, 1e-24
    %v218 = vmax.f32 %v126, 1e-24
    %v219 = vmax.f32 %v128, 1e-24
    %v220 = vmax.f32 %v130, 1e-24
    %v221 = vmax.f32 %v132, 1e-24
    %v222 = vmax.f32 %v134, 1e-24
    %v223 = vmax.f32 %v136, 1e-24
    %v224 = vmax.f32 %v138, 1e-24
    %v225 = vmax.f32 %v140, 1e-24
    %v226 = vmax.f32 %v142, 1e-24
    %v227 = vmax.f32 %v144, 1e-24
    %v228 = vmax.f32 %v146, 1e-24
    %v229 = vmax.f32 %v148, 1e-24
    %v230 = vmax.f32 %v150, 1e-24
    %v231 = vmax.f32 %v152, 1e-24
    %v232 = vmax.f32 %v154, 1e-24
    %v233 = vmax.f32 %v156, 1e-24
    %v234 = vmax.f32 %v158, 1e-24
    %v235 = vmax.f32 %v160, 1e-24
    %v236 = vmax.f32 %v162, 1e-24
    %v237 = vmax.f32 %v164, 1e-24
    %v238 = vmax.f32 %v166, 1e-24
    %v239 = vmax.f32 %v168, 1e-24
    %v240 = vmax.f32 %v170, 1e-24
    %v241 = vmax.f32 %v172, 1e-24
    %v242 = vmax.f32 %v174, 1e-24
    %v243 = vmax.f32 %v176, 1e-24
    %v244 = vmax.f32 %v178, 1e-24
    %v245 = vmax.f32 %v180, 1e-24
    %v246 = vmax.f32 %v182, 1e-24
    %v247 = vmax.f32 %v184, 1e-24
    %v248 = vmax.f32 %v186, 1e-24
    %v249 = vmax.f32 %v188, 1e-24
    %v250 = vmax.f32 %v190, 1e-24
    %v251 = vmax.f32 %v192, 1e-24
    %v252 = vmax.f32 %v194, 1e-24
    %v253 = vmax.f32 %v196, 1e-24
    %v254 = vmax.f32 %v198, 1e-24
    %v255 = vmax.f32 %v200, 1e-24
    %v256 = vmax.f32 %v202, 1e-24
    %v257 = vmax.f32 %v204, 1e-24
    %v258 = vmax.f32 %v206, 1e-24
    %v259 = vmax.f32 %v208, 1e-24
    %v260 = vmax.f32 %v210, 1e-24
    %v261 = vmax.f32 %v212, 1e-24
    %v262 = vmax.f32 %v214, 1e-24
    %v263 = vrsqrt.pop %v215
    %v264 = vrsqrt.pop %v216
    %v265 = vrsqrt.pop %v217
    %v266 = vrsqrt.pop %v218
    %v267 = vrsqrt.pop %v219
    %v268 = vrsqrt.pop %v220
    %v269 = vrsqrt.pop %v221
    %v270 = vrsqrt.pop %v222
    %v271 = vrsqrt.pop %v223
    %v272 = vrsqrt.pop %v224
    %v273 = vrsqrt.pop %v225
    %v274 = vrsqrt.pop %v226
    %v275 = vrsqrt.pop %v227
    %v276 = vrsqrt.pop %v228
    %v277 = vrsqrt.pop %v229
    %v278 = vrsqrt.pop %v230
    %v279 = vrsqrt.pop %v231
    %v280 = vrsqrt.pop %v232
    %v281 = vrsqrt.pop %v233
    %v282 = vrsqrt.pop %v234
    %v283 = vrsqrt.pop %v235
    %v284 = vrsqrt.pop %v236
    %v285 = vrsqrt.pop %v237
    %v286 = vrsqrt.pop %v238
    %v287 = vrsqrt.pop %v239
    %v288 = vrsqrt.pop %v240
    %v289 = vrsqrt.pop %v241
    %v290 = vrsqrt.pop %v242
    %v291 = vrsqrt.pop %v243
    %v292 = vrsqrt.pop %v244
    %v293 = vrsqrt.pop %v245
    %v294 = vrsqrt.pop %v246
    %v295 = vrsqrt.pop %v247
    %v296 = vrsqrt.pop %v248
    %v297 = vrsqrt.pop %v249
    %v298 = vrsqrt.pop %v250
    %v299 = vrsqrt.pop %v251
    %v300 = vrsqrt.pop %v252
    %v301 = vrsqrt.pop %v253
    %v302 = vrsqrt.pop %v254
    %v303 = vrsqrt.pop %v255
    %v304 = vrsqrt.pop %v256
    %v305 = vrsqrt.pop %v257
    %v306 = vrsqrt.pop %v258
    %v307 = vrsqrt.pop %v259
    %v308 = vrsqrt.pop %v260
    %v309 = vrsqrt.pop %v261
    %v310 = vrsqrt.pop %v262
    %v311 = vmul.f32 %v263, 64.0
    %v312 = vmul.f32 %v264, 64.0
    %v313 = vmul.f32 %v265, 64.0
    %v314 = vmul.f32 %v266, 64.0
    %v315 = vmul.f32 %v267, 64.0
    %v316 = vmul.f32 %v268, 64.0
    %v317 = vmul.f32 %v269, 64.0
    %v318 = vmul.f32 %v270, 64.0
    %v319 = vmul.f32 %v271, 64.0
    %v320 = vmul.f32 %v272, 64.0
    %v321 = vmul.f32 %v273, 64.0
    %v322 = vmul.f32 %v274, 64.0
    %v323 = vmul.f32 %v275, 64.0
    %v324 = vmul.f32 %v276, 64.0
    %v325 = vmul.f32 %v277, 64.0
    %v326 = vmul.f32 %v278, 64.0
    %v327 = vmul.f32 %v279, 64.0
    %v328 = vmul.f32 %v280, 64.0
    %v329 = vmul.f32 %v281, 64.0
    %v330 = vmul.f32 %v282, 64.0
    %v331 = vmul.f32 %v283, 64.0
    %v332 = vmul.f32 %v284, 64.0
    %v333 = vmul.f32 %v285, 64.0
    %v334 = vmul.f32 %v286, 64.0
    %v335 = vmul.f32 %v287, 64.0
    %v336 = vmul.f32 %v288, 64.0
    %v337 = vmul.f32 %v289, 64.0
    %v338 = vmul.f32 %v290, 64.0
    %v339 = vmul.f32 %v291, 64.0
    %v340 = vmul.f32 %v292, 64.0
    %v341 = vmul.f32 %v293, 64.0
    %v342 = vmul.f32 %v294, 64.0
    %v343 = vmul.f32 %v295, 64.0
    %v344 = vmul.f32 %v296, 64.0
    %v345 = vmul.f32 %v297, 64.0
    %v346 = vmul.f32 %v298, 64.0
    %v347 = vmul.f32 %v299, 64.0
    %v348 = vmul.f32 %v300, 64.0
    %v349 = vmul.f32 %v301, 64.0
    %v350 = vmul.f32 %v302, 64.0
    %v351 = vmul.f32 %v303, 64.0
    %v352 = vmul.f32 %v304, 64.0
    %v353 = vmul.f32 %v305, 64.0
    %v354 = vmul.f32 %v306, 64.0
    %v355 = vmul.f32 %v307, 64.0
    %v356 = vmul.f32 %v308, 64.0
    %v357 = vmul.f32 %v309, 64.0
    %v358 = vmul.f32 %v310, 64.0
    %v359 = vmul.f32 %v23, %v311
    %v360 = vmul.f32 %v24, %v312
    %v361 = vmul.f32 %v25, %v313
    %v362 = vmul.f32 %v26, %v314
    %v363 = vmul.f32 %v27, %v315
    %v364 = vmul.f32 %v28, %v316
    %v365 = vmul.f32 %v29, %v317
    %v366 = vmul.f32 %v30, %v318
    %v367 = vmul.f32 %v31, %v319
    %v368 = vmul.f32 %v32, %v320
    %v369 = vmul.f32 %v33, %v321
    %v370 = vmul.f32 %v34, %v322
    %v371 = vmul.f32 %v35, %v323
    %v372 = vmul.f32 %v36, %v324
    %v373 = vmul.f32 %v37, %v325
    %v374 = vmul.f32 %v38, %v326
    %v375 = vmul.f32 %v39, %v327
    %v376 = vmul.f32 %v40, %v328
    %v377 = vmul.f32 %v41, %v329
    %v378 = vmul.f32 %v42, %v330
    %v379 = vmul.f32 %v43, %v331
    %v380 = vmul.f32 %v44, %v332
    %v381 = vmul.f32 %v45, %v333
    %v382 = vmul.f32 %v46, %v334
    %v383 = vmul.f32 %v47, %v335
    %v384 = vmul.f32 %v48, %v336
    %v385 = vmul.f32 %v49, %v337
    %v386 = vmul.f32 %v50, %v338
    %v387 = vmul.f32 %v51, %v339
    %v388 = vmul.f32 %v52, %v340
    %v389 = vmul.f32 %v53, %v341
    %v390 = vmul.f32 %v54, %v342
    %v391 = vmul.f32 %v55, %v343
    %v392 = vmul.f32 %v56, %v344
    %v393 = vmul.f32 %v57, %v345
    %v394 = vmul.f32 %v58, %v346
    %v395 = vmul.f32 %v59, %v347
    %v396 = vmul.f32 %v60, %v348
    %v397 = vmul.f32 %v61, %v349
    %v398 = vmul.f32 %v62, %v350
    %v399 = vmul.f32 %v63, %v351
    %v400 = vmul.f32 %v64, %v352
    %v401 = vmul.f32 %v65, %v353
    %v402 = vmul.f32 %v66, %v354
    %v403 = vmul.f32 %v67, %v355
    %v404 = vmul.f32 %v68, %v356
    %v405 = vmul.f32 %v69, %v357
    %v406 = vmul.f32 %v70, %v358
    %v407 = vpack.c.bf16 %v360, %v359
    %v408 = vpack.c.bf16 %v362, %v361
    %v409 = vpack.c.bf16 %v364, %v363
    %v410 = vpack.c.bf16 %v366, %v365
    %v411 = vpack.c.bf16 %v368, %v367
    %v412 = vpack.c.bf16 %v370, %v369
    %v413 = vpack.c.bf16 %v372, %v371
    %v414 = vpack.c.bf16 %v374, %v373
    %v415 = vpack.c.bf16 %v376, %v375
    %v416 = vpack.c.bf16 %v378, %v377
    %v417 = vpack.c.bf16 %v380, %v379
    %v418 = vpack.c.bf16 %v382, %v381
    %v419 = vpack.c.bf16 %v384, %v383
    %v420 = vpack.c.bf16 %v386, %v385
    %v421 = vpack.c.bf16 %v388, %v387
    %v422 = vpack.c.bf16 %v390, %v389
    %v423 = vpack.c.bf16 %v392, %v391
    %v424 = vpack.c.bf16 %v394, %v393
    %v425 = vpack.c.bf16 %v396, %v395
    %v426 = vpack.c.bf16 %v398, %v397
    %v427 = vpack.c.bf16 %v400, %v399
    %v428 = vpack.c.bf16 %v402, %v401
    %v429 = vpack.c.bf16 %v404, %v403
    %v430 = vpack.c.bf16 %v406, %v405
    %v455 = vunpack.c.l.b16 %v407
    %v456 = vunpack.c.h.b16 %v407
    %v457 = vunpack.c.l.b16 %v408
    %v458 = vunpack.c.h.b16 %v408
    %v459 = vunpack.c.l.b16 %v409
    %v460 = vunpack.c.h.b16 %v409
    %v461 = vunpack.c.l.b16 %v410
    %v462 = vunpack.c.h.b16 %v410
    %v463 = vunpack.c.l.b16 %v411
    %v464 = vunpack.c.h.b16 %v411
    %v465 = vunpack.c.l.b16 %v412
    %v466 = vunpack.c.h.b16 %v412
    %v467 = vunpack.c.l.b16 %v413
    %v468 = vunpack.c.h.b16 %v413
    %v469 = vunpack.c.l.b16 %v414
    %v470 = vunpack.c.h.b16 %v414
    %v471 = vunpack.c.l.b16 %v415
    %v472 = vunpack.c.h.b16 %v415
    %v473 = vunpack.c.l.b16 %v416
    %v474 = vunpack.c.h.b16 %v416
    %v475 = vunpack.c.l.b16 %v417
    %v476 = vunpack.c.h.b16 %v417
    %v477 = vunpack.c.l.b16 %v418
    %v478 = vunpack.c.h.b16 %v418
    %v479 = vunpack.c.l.b16 %v419
    %v480 = vunpack.c.h.b16 %v419
    %v481 = vunpack.c.l.b16 %v420
    %v482 = vunpack.c.h.b16 %v420
    %v483 = vunpack.c.l.b16 %v421
    %v484 = vunpack.c.h.b16 %v421
    %v485 = vunpack.c.l.b16 %v422
    %v486 = vunpack.c.h.b16 %v422
    %v487 = vunpack.c.l.b16 %v423
    %v488 = vunpack.c.h.b16 %v423
    %v489 = vunpack.c.l.b16 %v424
    %v490 = vunpack.c.h.b16 %v424
    %v491 = vunpack.c.l.b16 %v425
    %v492 = vunpack.c.h.b16 %v425
    %v493 = vunpack.c.l.b16 %v426
    %v494 = vunpack.c.h.b16 %v426
    %v495 = vunpack.c.l.b16 %v427
    %v496 = vunpack.c.h.b16 %v427
    %v497 = vunpack.c.l.b16 %v428
    %v498 = vunpack.c.h.b16 %v428
    %v499 = vunpack.c.l.b16 %v429
    %v500 = vunpack.c.h.b16 %v429
    %v501 = vunpack.c.l.b16 %v430
    %v502 = vunpack.c.h.b16 %v430
    %v503 = vpack.c.b16 %v455, %v455
    %v504 = vpack.c.b16 %v456, %v456
    %v505 = vpack.c.b16 %v457, %v457
    %v506 = vpack.c.b16 %v458, %v458
    %v507 = vpack.c.b16 %v459, %v459
    %v508 = vpack.c.b16 %v460, %v460
    %v509 = vpack.c.b16 %v461, %v461
    %v510 = vpack.c.b16 %v462, %v462
    %v511 = vpack.c.b16 %v463, %v463
    %v512 = vpack.c.b16 %v464, %v464
    %v513 = vpack.c.b16 %v465, %v465
    %v514 = vpack.c.b16 %v466, %v466
    %v515 = vpack.c.b16 %v467, %v467
    %v516 = vpack.c.b16 %v468, %v468
    %v517 = vpack.c.b16 %v469, %v469
    %v518 = vpack.c.b16 %v470, %v470
    %v519 = vpack.c.b16 %v471, %v471
    %v520 = vpack.c.b16 %v472, %v472
    %v521 = vpack.c.b16 %v473, %v473
    %v522 = vpack.c.b16 %v474, %v474
    %v523 = vpack.c.b16 %v475, %v475
    %v524 = vpack.c.b16 %v476, %v476
    %v525 = vpack.c.b16 %v477, %v477
    %v526 = vpack.c.b16 %v478, %v478
    %v527 = vpack.c.b16 %v479, %v479
    %v528 = vpack.c.b16 %v480, %v480
    %v529 = vpack.c.b16 %v481, %v481
    %v530 = vpack.c.b16 %v482, %v482
    %v531 = vpack.c.b16 %v483, %v483
    %v532 = vpack.c.b16 %v484, %v484
    %v533 = vpack.c.b16 %v485, %v485
    %v534 = vpack.c.b16 %v486, %v486
    %v535 = vpack.c.b16 %v487, %v487
    %v536 = vpack.c.b16 %v488, %v488
    %v537 = vpack.c.b16 %v489, %v489
    %v538 = vpack.c.b16 %v490, %v490
    %v539 = vpack.c.b16 %v491, %v491
    %v540 = vpack.c.b16 %v492, %v492
    %v541 = vpack.c.b16 %v493, %v493
    %v542 = vpack.c.b16 %v494, %v494
    %v543 = vpack.c.b16 %v495, %v495
    %v544 = vpack.c.b16 %v496, %v496
    %v545 = vpack.c.b16 %v497, %v497
    %v546 = vpack.c.b16 %v498, %v498
    %v547 = vpack.c.b16 %v499, %v499
    %v548 = vpack.c.b16 %v500, %v500
    %v549 = vpack.c.b16 %v501, %v501
    %v550 = vpack.c.b16 %v502, %v502
    %599 = vst [vmem:[#allocation5] sm:$0xf] %v503
    %600 = vst [vmem:[#allocation5 + $0x4] sm:$0xf] %v504
    %601 = vst [vmem:[#allocation5 + $0x8] sm:$0xf] %v505
    %602 = vst [vmem:[#allocation5 + $0xc] sm:$0xf] %v506
    %603 = vst [vmem:[#allocation5 + $0x10] sm:$0xf] %v507
    %604 = vst [vmem:[#allocation5 + $0x14] sm:$0xf] %v508
    %605 = vst [vmem:[#allocation5 + $0x18] sm:$0xf] %v509
    %606 = vst [vmem:[#allocation5 + $0x1c] sm:$0xf] %v510
    %607 = vst [vmem:[#allocation5 + $0x20] sm:$0xf] %v511
    %608 = vst [vmem:[#allocation5 + $0x24] sm:$0xf] %v512
    %609 = vst [vmem:[#allocation5 + $0x28] sm:$0xf] %v513
    %610 = vst [vmem:[#allocation5 + $0x2c] sm:$0xf] %v514
    %611 = vst [vmem:[#allocation5 + $0x30] sm:$0xf] %v515
    %612 = vst [vmem:[#allocation5 + $0x34] sm:$0xf] %v516
    %613 = vst [vmem:[#allocation5 + $0x38] sm:$0xf] %v517
    %614 = vst [vmem:[#allocation5 + $0x3c] sm:$0xf] %v518
    %615 = vst [vmem:[#allocation5 + $0x40] sm:$0xf] %v519
    %616 = vst [vmem:[#allocation5 + $0x44] sm:$0xf] %v520
    %617 = vst [vmem:[#allocation5 + $0x48] sm:$0xf] %v521
    %618 = vst [vmem:[#allocation5 + $0x4c] sm:$0xf] %v522
    %619 = vst [vmem:[#allocation5 + $0x50] sm:$0xf] %v523
    %620 = vst [vmem:[#allocation5 + $0x54] sm:$0xf] %v524
    %621 = vst [vmem:[#allocation5 + $0x58] sm:$0xf] %v525
    %622 = vst [vmem:[#allocation5 + $0x5c] sm:$0xf] %v526
    %623 = vst [vmem:[#allocation5 + $0x60] sm:$0xf] %v527
    %624 = vst [vmem:[#allocation5 + $0x64] sm:$0xf] %v528
    %625 = vst [vmem:[#allocation5 + $0x68] sm:$0xf] %v529
    %626 = vst [vmem:[#allocation5 + $0x6c] sm:$0xf] %v530
    %627 = vst [vmem:[#allocation5 + $0x70] sm:$0xf] %v531
    %628 = vst [vmem:[#allocation5 + $0x74] sm:$0xf] %v532
    %629 = vst [vmem:[#allocation5 + $0x78] sm:$0xf] %v533
    %630 = vst [vmem:[#allocation5 + $0x7c] sm:$0xf] %v534
    %631 = vst [vmem:[#allocation5 + $0x80] sm:$0xf] %v535
    %632 = vst [vmem:[#allocation5 + $0x84] sm:$0xf] %v536
    %633 = vst [vmem:[#allocation5 + $0x88] sm:$0xf] %v537
    %634 = vst [vmem:[#allocation5 + $0x8c] sm:$0xf] %v538
    %635 = vst [vmem:[#allocation5 + $0x90] sm:$0xf] %v539
    %636 = vst [vmem:[#allocation5 + $0x94] sm:$0xf] %v540
    %637 = vst [vmem:[#allocation5 + $0x98] sm:$0xf] %v541
    %638 = vst [vmem:[#allocation5 + $0x9c] sm:$0xf] %v542
    %639 = vst [vmem:[#allocation5 + $0xa0] sm:$0xf] %v543
    %640 = vst [vmem:[#allocation5 + $0xa4] sm:$0xf] %v544
    %641 = vst [vmem:[#allocation5 + $0xa8] sm:$0xf] %v545
    %642 = vst [vmem:[#allocation5 + $0xac] sm:$0xf] %v546
    %643 = vst [vmem:[#allocation5 + $0xb0] sm:$0xf] %v547
    %644 = vst [vmem:[#allocation5 + $0xb4] sm:$0xf] %v548
    %645 = vst [vmem:[#allocation5 + $0xb8] sm:$0xf] %v549
    %646 = vst [vmem:[#allocation5 + $0xbc] sm:$0xf] %v550
    // Predicated region
    $region10: #{tpu_custom_call.1} parent=1 // pred_check
      _
    $region11: #{tpu_custom_call.1} parent=1 // pred_check_branch
      %648 = sbr.rel (0) target = $region13
    $region12: #{tpu_custom_call.1} parent=1 // pred_region
      %s650 = ssub.s32 3072, 3072
      %651 = vsyncadd [#allocation4], %s650
      %s652 = sshll.u32 [#allocation5], 4
      %s653 = int_to_ptr.vmem [resolvable:$true] %s652
      %658 = dma.vmem_to_hbm [thread:$0]  %s653, 3072, %s1, [#allocation4], 64, 64, 4
    $region13: #{tpu_custom_call.1} parent=1 // pred_fallthru
      _
    // Predicated region
    $region14: #{tpu_custom_call.1} parent=1 // pred_check
      _
    $region15: #{tpu_custom_call.1} parent=1 // pred_check_branch
      %660 = sbr.rel (0) target = $region17
    $region16: #{tpu_custom_call.1} parent=1 // pred_region
      %661 = dma.done [#allocation4], 3072
    $region17: #{tpu_custom_call.1} parent=1 // pred_fallthru
      _
    %662 = vsyncpa [#allocation3], 1
    %663 = vsyncpa [#allocation4], 1

</llo_original>
